<compile_context>
chip_gen: v6e
topology: v6e:2x2x1
jax: 0.10.0
libtpu: 0.0.40
codegen_flags: <defaults>
</compile_context>

<pallas_src>
import functools
import math

import jax
import jax.numpy as jnp
import numpy as np
from jax.experimental import pallas as pl
from jax.experimental.pallas import tpu as pltpu


def get_capacity(num_tokens: int, num_experts: int,
                 k_value: int = 1,
                 capacity_factor: float = 1.25,
                 min_capacity: int = 4) -> int:
    """Mirrors MoeRouter.get_capacity for the training path."""
    capacity = math.floor(k_value * capacity_factor * num_tokens / num_experts)
    capacity += capacity % 2
    capacity = max(capacity, min_capacity)
    assert capacity > 0
    return capacity


def _top1_router_kernel(x_ref, cw_ref, sec_ref, laux_ref,
                        count_ref, me_ref, tril_ref,
                        *, capacity: int, num_tokens: int):
    """Processes one token tile; carries per-expert counts / logit sums across tiles."""
    i = pl.program_id(0)
    x = x_ref[...]                                   # [TS, E] f32
    ts, e = x.shape
    c = capacity

    @pl.when(i == 0)
    def _init():
        count_ref[...] = jnp.zeros_like(count_ref)   # running one-hot counts per expert
        me_ref[...] = jnp.zeros_like(me_ref)         # running sum of softmax probs
        # Strict lower-triangular {0,1} matrix, built once and reused every tile.
        ri = jax.lax.broadcasted_iota(jnp.int32, (ts, ts), 0)
        ci = jax.lax.broadcasted_iota(jnp.int32, (ts, ts), 1)
        tril_ref[...] = (ci < ri).astype(jnp.bfloat16)

    # ---- softmax pieces (f32 elementwise; exp on EUP, one divide per token) ----
    row_max = jnp.max(x, axis=-1, keepdims=True)     # [TS, 1]
    ex = jnp.exp(x - row_max)                        # [TS, E]
    denom = jnp.sum(ex, axis=-1, keepdims=True)      # [TS, 1]
    gate = 1.0 / denom                               # [TS, 1] softmax prob of argmax expert
    logits = ex * gate                               # [TS, E] full softmax (only for l_aux)

    # ---- top-1 expert one-hot (first-occurrence argmax tie-break) ----
    eid = jax.lax.broadcasted_iota(jnp.int32, (ts, e), 1)
    is_max = x == row_max
    top1 = jnp.min(jnp.where(is_max, eid, jnp.int32(e)), axis=-1, keepdims=True)  # [TS,1]
    mask = (eid == top1).astype(jnp.float32)         # [TS, E] one-hot

    # ---- exclusive per-expert cumsum inside the tile: cached tril matmul on MXU ----
    excl = jnp.dot(tril_ref[...], mask.astype(jnp.bfloat16),
                   preferred_element_type=jnp.float32)            # [TS, E], integer-valued

    # ---- global exclusive rank: within-tile count + carried offset from previous tiles ----
    ranks_e = excl + count_ref[...]                  # [TS, E]
    rank = jnp.sum(ranks_e * mask, axis=-1, keepdims=True)        # [TS, 1] f32 (exact ints)
    kept = rank < jnp.float32(c)                     # [TS, 1] within-capacity ('first' policy)

    # ---- update carried stats (used by later tiles and for l_aux at the end) ----
    count_ref[...] = count_ref[...] + jnp.sum(mask, axis=0, keepdims=True)
    me_ref[...] = me_ref[...] + jnp.sum(logits, axis=0, keepdims=True)

    # ---- fused, lane-dense outer product over the flattened (E*C) last axis ----
    # cw[s, e*C + c] is non-zero only at (top1[s], rank[s]) and equals gate[s].
    # Single compare against the fused flat index; dropped tokens poisoned to -1
    # so they can never collide with another expert's capacity slot.
    rank_i = rank.astype(jnp.int32)                  # [TS, 1]
    flat = jnp.where(kept, top1 * jnp.int32(c) + rank_i, jnp.int32(-1))   # [TS, 1]
    f = jax.lax.broadcasted_iota(jnp.int32, (ts, e * c), 1)
    hit = f == flat                                  # [TS, E*C] bool
    cw_ref[...] = jnp.where(hit, gate, jnp.float32(0.0))
    sec_ref[...] = hit.astype(jnp.int8)              # gate > 0 always, so (cw != 0) == hit

    @pl.when(i == pl.num_programs(0) - 1)
    def _finalize():
        inv = jnp.float32(1.0 / num_tokens)
        me = me_ref[...] * inv                       # mean(logits, 0)
        ce = count_ref[...] * inv                    # mean(one-hot mask, 0)
        laux_ref[...] = jnp.float32(e) * jnp.sum(me * ce, axis=-1, keepdims=True)


def _choose_tile_s(s: int, e: int, c: int) -> int:
    # Largest multiple-of-32 tile dividing S that keeps the per-tile f32
    # combine-weight block <= ~4 MiB, so double-buffered outputs (+ int8 mask,
    # input, and the TSxTS bf16 tril scratch) fit the default scoped-VMEM limit
    # on every chip (v5e/v6e/v7x).
    for ts in (1024, 512, 256, 128, 64, 32):
        if s % ts == 0 and ts * e * c * 4 <= 4 * 1024 * 1024:
            return ts
    return s   # small / awkward S: single full-extent tile (always legal)


def top1_router(inputs: jax.Array,
                capacity_factor_train: float = 1.25,
                min_capacity: int = 4,
                tile_s: int | None = None):
    """Returns (combine_weights [S,E,C] f32, sec_mask [S,E,C] bool, l_aux scalar f32)."""
    assert inputs.dtype == jnp.float32
    s, e = inputs.shape
    capacity = get_capacity(s, e, 1, capacity_factor_train, min_capacity)

    if tile_s is None or s % tile_s != 0 or (tile_s != s and tile_s % 32 != 0):
        tile_s = _choose_tile_s(s, e, capacity)
    grid = (s // tile_s,)

    kernel = functools.partial(_top1_router_kernel, capacity=capacity, num_tokens=s)

    # Outputs are emitted with the (E, C) axes flattened onto the lane axis:
    # identical HBM layout to [S, E, C] (row-major), so the reshape below is free,
    # but in-kernel stores are much denser than a [TS, E, C] block with tiny C.
    out_shapes = (
        jax.ShapeDtypeStruct((s, e * capacity), jnp.float32),  # combine_weights (flat)
        jax.ShapeDtypeStruct((s, e * capacity), jnp.int8),     # sec_mask (flat, int8)
        jax.ShapeDtypeStruct((1, 1), jnp.float32),             # routing aux loss
    )

    cw_flat, sec_flat, laux = pl.pallas_call(
        kernel,
        out_shape=out_shapes,
        grid_spec=pltpu.PrefetchScalarGridSpec(
            num_scalar_prefetch=0,
            grid=grid,
            in_specs=[pl.BlockSpec((tile_s, e), lambda i: (i, 0))],
            out_specs=(
                pl.BlockSpec((tile_s, e * capacity), lambda i: (i, 0)),
                pl.BlockSpec((tile_s, e * capacity), lambda i: (i, 0)),
                pl.BlockSpec((1, 1), lambda i: (0, 0)),
            ),
            scratch_shapes=[
                pltpu.VMEM((1, e), jnp.float32),          # running per-expert token count
                pltpu.VMEM((1, e), jnp.float32),          # running sum of softmax logits
                pltpu.VMEM((tile_s, tile_s), jnp.bfloat16),  # cached strict-lower-tri matrix
            ],
        ),
        compiler_params=pltpu.CompilerParams(
            dimension_semantics=("arbitrary",),     # carried cumsum => sequential token axis
        ),
    )(inputs)

    cw = cw_flat.reshape(s, e, capacity)            # metadata-only reshape
    sec = sec_flat.reshape(s, e, capacity).astype(jnp.bool_)
    return cw, sec, laux[0, 0]


# ----------------------------- pure-JAX reference -----------------------------
def top1_router_ref(inputs, capacity_factor_train=1.25, min_capacity=4):
    s, e = inputs.shape
    capacity = get_capacity(s, e, 1, capacity_factor_train, min_capacity)
    logits = jax.nn.softmax(inputs, axis=-1)
    top1 = jnp.argmax(inputs, axis=-1)
    mask = jax.nn.one_hot(top1, e, dtype=jnp.int32)
    me = jnp.mean(logits, axis=0)
    ce = jnp.mean(mask.astype(jnp.float32), axis=0)
    l_aux = e * jnp.sum(me * ce)
    ranks = jnp.cumsum(mask, axis=0) - 1                       # moe_cumsum
    mask = mask * (ranks < capacity).astype(jnp.int32)
    rank_per_tok = jnp.sum(mask * ranks, axis=-1)
    rank_oh = jax.nn.one_hot(rank_per_tok, capacity, dtype=jnp.float32)
    weight = mask.astype(jnp.float32) * logits
    cw = weight[:, :, None] * rank_oh[:, None, :]
    return cw, cw != 0.0, l_aux


if __name__ == "__main__":
    S, E = 128, 8      # tokens x experts (capacity = floor(1.25*128/8) = 20)
    key = jax.random.PRNGKey(0)
    inputs = jax.random.normal(key, (S, E), dtype=jnp.float32)

    # tile_s=32 -> grid of 4 token tiles; exercises the carried cumsum / l_aux accumulation.
    cw, sec, laux = top1_router(inputs, tile_s=32)
    jax.block_until_ready((cw, sec, laux))

    cw_ref, sec_ref, laux_ref = top1_router_ref(inputs)
    assert cw.shape == cw_ref.shape and sec.dtype == jnp.bool_
    assert np.allclose(np.asarray(cw), np.asarray(cw_ref), atol=1e-5, rtol=1e-5)
    assert np.array_equal(np.asarray(sec), np.asarray(sec_ref))
    assert np.allclose(float(laux), float(laux_ref), atol=1e-5, rtol=1e-5)

    print("KERNEL_OK")
</pallas_src>

<mosaic_0001>
module attributes {stable_mosaic.version = 11 : i64} {
  func.func @_top1_router_kernel(%arg0: i32, %arg1: memref<32x8xf32, #tpu.memory_space<vmem>>, %arg2: memref<32x160xf32, #tpu.memory_space<vmem>>, %arg3: memref<32x160xi8, #tpu.memory_space<vmem>>, %arg4: memref<1x1xf32, #tpu.memory_space<vmem>>, %arg5: memref<1x8xf32, #tpu.memory_space<vmem>>, %arg6: memref<1x8xf32, #tpu.memory_space<vmem>>, %arg7: memref<32x32xbf16, #tpu.memory_space<vmem>>) attributes {dimension_semantics = [#tpu.dimension_semantics<arbitrary>], iteration_bounds = array<i64: 4>, scalar_prefetch = 0 : i64, scratch_operands = 3 : i64, tpu.core_type = #tpu.core_type<tc>, window_params = [{transform_indices = @transform_0, window_bounds = array<i64: 32, 8>}, {transform_indices = @transform_1, window_bounds = array<i64: 32, 160>}, {transform_indices = @transform_2, window_bounds = array<i64: 32, 160>}, {pipeline_mode = #tpu.pipeline_mode<synchronous>, transform_indices = @transform_3, window_bounds = array<i64: 1, 1>}]} {
    %c0 = arith.constant 0 : index
    %c0_0 = arith.constant 0 : index
    %0 = vector.load %arg1[%c0, %c0_0] : memref<32x8xf32, #tpu.memory_space<vmem>>, vector<32x8xf32>
    %c0_i32 = arith.constant 0 : i32
    %1 = arith.cmpi eq, %arg0, %c0_i32 : i32
    %2 = arith.extui %1 : i1 to i32
    %c0_i32_1 = arith.constant 0 : i32
    %3 = arith.cmpi ne, %2, %c0_i32_1 : i32
    scf.if %3 {
      %cst_28 = arith.constant 0.000000e+00 : f32
      %66 = vector.broadcast %cst_28 : f32 to vector<1x8xf32>
      %c0_29 = arith.constant 0 : index
      %c0_30 = arith.constant 0 : index
      %67 = vector.load %arg5[%c0_29, %c0_30] : memref<1x8xf32, #tpu.memory_space<vmem>>, vector<1x8xf32>
      tpu.vector_store %arg5[%c0_29, %c0_30], %66 {strides = array<i32>} : memref<1x8xf32, #tpu.memory_space<vmem>>, vector<1x8xf32>,
      %cst_31 = arith.constant 0.000000e+00 : f32
      %68 = vector.broadcast %cst_31 : f32 to vector<1x8xf32>
      %c0_32 = arith.constant 0 : index
      %c0_33 = arith.constant 0 : index
      %69 = vector.load %arg6[%c0_32, %c0_33] : memref<1x8xf32, #tpu.memory_space<vmem>>, vector<1x8xf32>
      tpu.vector_store %arg6[%c0_32, %c0_33], %68 {strides = array<i32>} : memref<1x8xf32, #tpu.memory_space<vmem>>, vector<1x8xf32>,
      %70 = tpu.iota {dimensions = array<i32: 0>} : vector<32x32xi32>
      %71 = tpu.iota {dimensions = array<i32: 1>} : vector<32x32xi32>
      %72 = arith.cmpi slt, %71, %70 : vector<32x32xi32>
      %73 = arith.extui %72 : vector<32x32xi1> to vector<32x32xi32>
      %74 = arith.sitofp %73 : vector<32x32xi32> to vector<32x32xf32>
      %75 = arith.truncf %74 : vector<32x32xf32> to vector<32x32xbf16>
      %c0_34 = arith.constant 0 : index
      %c0_35 = arith.constant 0 : index
      %76 = vector.load %arg7[%c0_34, %c0_35] : memref<32x32xbf16, #tpu.memory_space<vmem>>, vector<32x32xbf16>
      tpu.vector_store %arg7[%c0_34, %c0_35], %75 {strides = array<i32>} : memref<32x32xbf16, #tpu.memory_space<vmem>>, vector<32x32xbf16>,
    } else {
    }
    %cst = arith.constant dense<0xFF800000> : vector<32xf32>
    %4 = vector.multi_reduction <maximumf>, %0, %cst [1] : vector<32x8xf32> to vector<32xf32>
    %5 = vector.shape_cast %4 : vector<32xf32> to vector<32x1xf32>
    %6 = vector.broadcast %5 : vector<32x1xf32> to vector<32x8xf32>
    %7 = arith.subf %0, %6 : vector<32x8xf32>
    %8 = math.exp %7 : vector<32x8xf32>
    %cst_2 = arith.constant dense<0.000000e+00> : vector<32xf32>
    %9 = vector.multi_reduction <add>, %8, %cst_2 [1] : vector<32x8xf32> to vector<32xf32>
    %10 = vector.shape_cast %9 : vector<32xf32> to vector<32x1xf32>
    %cst_3 = arith.constant 1.000000e+00 : f32
    %11 = vector.broadcast %cst_3 : f32 to vector<32x1xf32>
    %12 = arith.divf %11, %10 : vector<32x1xf32>
    %13 = vector.broadcast %12 : vector<32x1xf32> to vector<32x8xf32>
    %14 = arith.mulf %8, %13 : vector<32x8xf32>
    %15 = tpu.iota {dimensions = array<i32: 1>} : vector<32x8xi32>
    %16 = vector.broadcast %5 : vector<32x1xf32> to vector<32x8xf32>
    %17 = arith.cmpf oeq, %0, %16 : vector<32x8xf32>
    %c8_i32 = arith.constant 8 : i32
    %18 = vector.broadcast %c8_i32 : i32 to vector<32x8xi32>
    %19 = arith.select %17, %15, %18 : vector<32x8xi1>, vector<32x8xi32>
    %cst_4 = arith.constant dense<2147483647> : vector<32xi32>
    %20 = vector.multi_reduction <minsi>, %19, %cst_4 [1] : vector<32x8xi32> to vector<32xi32>
    %21 = vector.shape_cast %20 : vector<32xi32> to vector<32x1xi32>
    %22 = vector.broadcast %21 : vector<32x1xi32> to vector<32x8xi32>
    %23 = arith.cmpi eq, %15, %22 : vector<32x8xi32>
    %24 = arith.extui %23 : vector<32x8xi1> to vector<32x8xi32>
    %25 = arith.sitofp %24 : vector<32x8xi32> to vector<32x8xf32>
    %c0_5 = arith.constant 0 : index
    %c0_6 = arith.constant 0 : index
    %26 = vector.load %arg7[%c0_5, %c0_6] : memref<32x32xbf16, #tpu.memory_space<vmem>>, vector<32x32xbf16>
    %27 = arith.truncf %25 : vector<32x8xf32> to vector<32x8xbf16>
    %cst_7 = arith.constant dense<0.000000e+00> : vector<32x8xf32>
    %28 = tpu.matmul %26, %27, %cst_7 {dimension_numbers = #tpu.dot_dimension_numbers<[1], [0], [0], [1], [0, 0, 1, 1], [], []>} : vector<32x32xbf16>, vector<32x8xbf16>, vector<32x8xf32> -> vector<32x8xf32>
    %c0_8 = arith.constant 0 : index
    %c0_9 = arith.constant 0 : index
    %29 = vector.load %arg5[%c0_8, %c0_9] : memref<1x8xf32, #tpu.memory_space<vmem>>, vector<1x8xf32>
    %30 = vector.broadcast %29 : vector<1x8xf32> to vector<32x8xf32>
    %31 = arith.addf %28, %30 : vector<32x8xf32>
    %32 = arith.mulf %31, %25 : vector<32x8xf32>
    %cst_10 = arith.constant dense<0.000000e+00> : vector<32xf32>
    %33 = vector.multi_reduction <add>, %32, %cst_10 [1] : vector<32x8xf32> to vector<32xf32>
    %34 = vector.shape_cast %33 : vector<32xf32> to vector<32x1xf32>
    %cst_11 = arith.constant 2.000000e+01 : f32
    %35 = vector.broadcast %cst_11 : f32 to vector<32x1xf32>
    %36 = arith.cmpf olt, %34, %35 : vector<32x1xf32>
    %c0_12 = arith.constant 0 : index
    %c0_13 = arith.constant 0 : index
    %37 = vector.load %arg5[%c0_12, %c0_13] : memref<1x8xf32, #tpu.memory_space<vmem>>, vector<1x8xf32>
    %cst_14 = arith.constant dense<0.000000e+00> : vector<8xf32>
    %38 = vector.multi_reduction <add>, %25, %cst_14 [0] : vector<32x8xf32> to vector<8xf32>
    %39 = vector.shape_cast %38 : vector<8xf32> to vector<1x8xf32>
    %40 = arith.addf %37, %39 : vector<1x8xf32>
    %c0_15 = arith.constant 0 : index
    %c0_16 = arith.constant 0 : index
    %41 = vector.load %arg5[%c0_15, %c0_16] : memref<1x8xf32, #tpu.memory_space<vmem>>, vector<1x8xf32>
    tpu.vector_store %arg5[%c0_15, %c0_16], %40 {strides = array<i32>} : memref<1x8xf32, #tpu.memory_space<vmem>>, vector<1x8xf32>,
    %c0_17 = arith.constant 0 : index
    %c0_18 = arith.constant 0 : index
    %42 = vector.load %arg6[%c0_17, %c0_18] : memref<1x8xf32, #tpu.memory_space<vmem>>, vector<1x8xf32>
    %cst_19 = arith.constant dense<0.000000e+00> : vector<8xf32>
    %43 = vector.multi_reduction <add>, %14, %cst_19 [0] : vector<32x8xf32> to vector<8xf32>
    %44 = vector.shape_cast %43 : vector<8xf32> to vector<1x8xf32>
    %45 = arith.addf %42, %44 : vector<1x8xf32>
    %c0_20 = arith.constant 0 : index
    %c0_21 = arith.constant 0 : index
    %46 = vector.load %arg6[%c0_20, %c0_21] : memref<1x8xf32, #tpu.memory_space<vmem>>, vector<1x8xf32>
    tpu.vector_store %arg6[%c0_20, %c0_21], %45 {strides = array<i32>} : memref<1x8xf32, #tpu.memory_space<vmem>>, vector<1x8xf32>,
    %47 = arith.fptosi %34 : vector<32x1xf32> to vector<32x1xi32>
    %c20_i32 = arith.constant 20 : i32
    %48 = vector.broadcast %c20_i32 : i32 to vector<32x1xi32>
    %49 = arith.muli %21, %48 : vector<32x1xi32>
    %50 = arith.addi %49, %47 : vector<32x1xi32>
    %c-1_i32 = arith.constant -1 : i32
    %51 = vector.broadcast %c-1_i32 : i32 to vector<32x1xi32>
    %52 = arith.select %36, %50, %51 : vector<32x1xi1>, vector<32x1xi32>
    %53 = tpu.iota {dimensions = array<i32: 1>} : vector<32x160xi32>
    %54 = vector.broadcast %52 : vector<32x1xi32> to vector<32x160xi32>
    %55 = arith.cmpi eq, %53, %54 : vector<32x160xi32>
    %cst_22 = arith.constant 0.000000e+00 : f32
    %56 = vector.shape_cast %12 : vector<32x1xf32> to vector<32x1xf32>
    %57 = vector.broadcast %56 : vector<32x1xf32> to vector<32x160xf32>
    %58 = vector.broadcast %cst_22 : f32 to vector<32x160xf32>
    %59 = arith.select %55, %57, %58 : vector<32x160xi1>, vector<32x160xf32>
    %c0_23 = arith.constant 0 : index
    %c0_24 = arith.constant 0 : index
    %60 = vector.load %arg2[%c0_23, %c0_24] : memref<32x160xf32, #tpu.memory_space<vmem>>, vector<32x160xf32>
    tpu.vector_store %arg2[%c0_23, %c0_24], %59 {strides = array<i32>} : memref<32x160xf32, #tpu.memory_space<vmem>>, vector<32x160xf32>,
    %61 = arith.extui %55 : vector<32x160xi1> to vector<32x160xi8>
    %c0_25 = arith.constant 0 : index
    %c0_26 = arith.constant 0 : index
    %62 = vector.load %arg3[%c0_25, %c0_26] : memref<32x160xi8, #tpu.memory_space<vmem>>, vector<32x160xi8>
    tpu.vector_store %arg3[%c0_25, %c0_26], %61 {strides = array<i32>} : memref<32x160xi8, #tpu.memory_space<vmem>>, vector<32x160xi8>,
    %c3_i32 = arith.constant 3 : i32
    %63 = arith.cmpi eq, %arg0, %c3_i32 : i32
    %64 = arith.extui %63 : i1 to i32
    %c0_i32_27 = arith.constant 0 : i32
    %65 = arith.cmpi ne, %64, %c0_i32_27 : i32
    scf.if %65 {
      %c0_28 = arith.constant 0 : index
      %c0_29 = arith.constant 0 : index
      %66 = vector.load %arg6[%c0_28, %c0_29] : memref<1x8xf32, #tpu.memory_space<vmem>>, vector<1x8xf32>
      %cst_30 = arith.constant 7.812500e-03 : f32
      %67 = vector.broadcast %cst_30 : f32 to vector<1x8xf32>
      %68 = arith.mulf %66, %67 : vector<1x8xf32>
      %c0_31 = arith.constant 0 : index
      %c0_32 = arith.constant 0 : index
      %69 = vector.load %arg5[%c0_31, %c0_32] : memref<1x8xf32, #tpu.memory_space<vmem>>, vector<1x8xf32>
      %cst_33 = arith.constant 7.812500e-03 : f32
      %70 = vector.broadcast %cst_33 : f32 to vector<1x8xf32>
      %71 = arith.mulf %69, %70 : vector<1x8xf32>
      %72 = arith.mulf %68, %71 : vector<1x8xf32>
      %cst_34 = arith.constant dense<0.000000e+00> : vector<1xf32>
      %73 = vector.multi_reduction <add>, %72, %cst_34 [1] : vector<1x8xf32> to vector<1xf32>
      %74 = vector.shape_cast %73 : vector<1xf32> to vector<1x1xf32>
      %cst_35 = arith.constant 8.000000e+00 : f32
      %75 = vector.broadcast %cst_35 : f32 to vector<1x1xf32>
      %76 = arith.mulf %75, %74 : vector<1x1xf32>
      %c0_36 = arith.constant 0 : index
      %c0_37 = arith.constant 0 : index
      %77 = vector.load %arg4[%c0_36, %c0_37] : memref<1x1xf32, #tpu.memory_space<vmem>>, vector<1x1xf32>
      tpu.vector_store %arg4[%c0_36, %c0_37], %76 {strides = array<i32>} : memref<1x1xf32, #tpu.memory_space<vmem>>, vector<1x1xf32>,
    } else {
    }
    return
  }
  func.func @transform_0(%arg0: i32) -> (i32, i32) {
    %c0_i32 = arith.constant 0 : i32
    %c0_i32_0 = arith.constant 0 : i32
    return %arg0, %c0_i32 : i32, i32
  }
  func.func @transform_1(%arg0: i32) -> (i32, i32) {
    %c0_i32 = arith.constant 0 : i32
    %c0_i32_0 = arith.constant 0 : i32
    return %arg0, %c0_i32 : i32, i32
  }
  func.func @transform_2(%arg0: i32) -> (i32, i32) {
    %c0_i32 = arith.constant 0 : i32
    %c0_i32_0 = arith.constant 0 : i32
    return %arg0, %c0_i32 : i32, i32
  }
  func.func @transform_3(%arg0: i32) -> (i32, i32) {
    %c0_i32 = arith.constant 0 : i32
    %c0_i32_0 = arith.constant 0 : i32
    %c0_i32_1 = arith.constant 0 : i32
    return %c0_i32, %c0_i32_0 : i32, i32
  }
}

</mosaic_0001>

<llo_original>
// kernel: tpu_custom_call.1
$region0: #{tpu_custom_call.1}
  #allocation0 [shape = 'u32[]', space=smem, size = 0x4, offset = 0x4, fixed_abs, tag = 'smem constant byte address 0x4 - core index']
  #allocation1 [shape = 'u32[144,128]{1,0:T(1,128)}', space=vmem, size = 0x12000, scoped, tag = 'internal scratch']
  #allocation2 [shape = 'f32[1,8]{1,0:T(1,128)}', space=vmem, size = 0x200, scoped, tag = 'scratch operand']
  #allocation3 [shape = 'f32[1,8]{1,0:T(1,128)}', space=vmem, size = 0x200, scoped, tag = 'scratch operand']
  #allocation4 [shape = 'bf16[32,32]{1,0:T(8,128)(2,1)}', space=vmem, size = 0x2000, scoped, tag = 'scratch operand']
  %s0 = inlined_call_operand.vmem [shape: f32[128,8], index: 0, kind: input, shape index: {}]
  %s1 = inlined_call_operand.vmem [shape: f32[128,160], index: 1, kind: output, shape index: {0}]
  %s2 = inlined_call_operand.vmem [shape: s8[128,160], index: 2, kind: output, shape index: {1}]
  %s3 = inlined_call_operand.hbm [shape: f32[1,1], index: 3, kind: output, shape index: {2}]
  %4 = xla_tuple %s1, %s2, %s3
  %s5 = sld [smem:[#allocation0]]
  $region61: #{tpu_custom_call.1} parent=0
    _
  %s7 = ssub.s32 1, %s5
  %s8 = scalar_select 0, %s7, %s5
  $region1: #{tpu_custom_call.1} parent=0
    #allocation5 [shape = 'u8[512]{0}', space=vmem, size = 0x400, scoped, tag = 'output window, operand 2, single buffered']
    #allocation6 [shape = 's32[2]{0}', space=sflag, size = 0x8, scoped, tag = 'scoped memory for tpu_custom_call.1']
    %9 = vsyncpa [#allocation6], 0
    loop: start=0, step=1, limit=6
    $region2: #{tpu_custom_call.1} parent=1 // loop_pre_header
      _
    $region3: #{tpu_custom_call.1} parent=1 // loop_header
      %s11 = sphi 0, %s15
      %p12 = scmp.ge.s32.totalorder %s11, 6
      %s21 = sphi 0, %s23
      %s24 = sphi 0, %s21
      %s25 = sphi 0, %s24
      %s41 = sphi 0, %s25
      %s47 = sphi 0, %s49
      %s50 = sphi 0, %s47
      %s51 = sphi 0, %s50
      %s67 = sphi 0, %s51
      %s73 = sphi 0, %s75
      %s76 = sphi 0, %s73
      %s77 = sphi 0, %s76
      %s93 = sphi 0, %s77
      %s97 = sphi 0, %s97
      %s99 = sphi 0, %s97
      %s100 = sphi 0, %s99
      %s114 = sphi 0, %s100
    $region4: #{tpu_custom_call.1} parent=1 // loop_header_branch
      %14 = sbr.rel (%p12) target = $region8
    $region5: #{tpu_custom_call.1} parent=1 // loop_body
      %s16 = ssub.s32 %s11, 1
      %s17 = ssub.s32 %s11, 2
      %s18 = sadd.s32 %s11, 1
      %s19 = ssub.s32 %s11, %s18
      %p20 = scmp.eq.s32.totalorder %s19, 0
      %s22 = sadd.s32 %s21, 1
      %s23 = scalar_select %p20, %s21, %s22
      %p26 = pneg %p20
      %p27 = scmp.eq.s32.totalorder %s11, 3
      %p28 = por %p26, %p27
      %p29 = scmp.ne.s32.totalorder %s21, %s24
      %p30 = scmp.eq.s32.totalorder %s11, 0
      %p31 = por %p29, %p30
      %p32 = scmp.ne.s32.totalorder %s21, %s24
      %p33 = scmp.eq.s32.totalorder %s16, 3
      %p34 = por %p32, %p33
      %p35 = scmp.ne.s32.totalorder %s24, %s25
      %p36 = scmp.eq.s32.totalorder %s16, 0
      %p37 = por %p35, %p36
      %p38 = scmp.ne.s32.totalorder %s24, %s25
      %p39 = scmp.eq.s32.totalorder %s17, 3
      %p40 = por %p38, %p39
      %p42 = scmp.ne.s32.totalorder %s25, %s41
      %p43 = scmp.eq.s32.totalorder %s17, 0
      %p44 = por %p42, %p43
      %s45 = ssub.s32 %s11, %s18
      %p46 = scmp.eq.s32.totalorder %s45, 0
      %s48 = sadd.s32 %s47, 1
      %s49 = scalar_select %p46, %s47, %s48
      %p52 = pneg %p46
      %p53 = scmp.eq.s32.totalorder %s11, 3
      %p54 = por %p52, %p53
      %p55 = scmp.ne.s32.totalorder %s47, %s50
      %p56 = scmp.eq.s32.totalorder %s11, 0
      %p57 = por %p55, %p56
      %p58 = scmp.ne.s32.totalorder %s47, %s50
      %p59 = scmp.eq.s32.totalorder %s16, 3
      %p60 = por %p58, %p59
      %p61 = scmp.ne.s32.totalorder %s50, %s51
      %p62 = scmp.eq.s32.totalorder %s16, 0
      %p63 = por %p61, %p62
      %p64 = scmp.ne.s32.totalorder %s50, %s51
      %p65 = scmp.eq.s32.totalorder %s17, 3
      %p66 = por %p64, %p65
      %p68 = scmp.ne.s32.totalorder %s51, %s67
      %p69 = scmp.eq.s32.totalorder %s17, 0
      %p70 = por %p68, %p69
      %s71 = ssub.s32 %s11, %s18
      %p72 = scmp.eq.s32.totalorder %s71, 0
      %s74 = sadd.s32 %s73, 1
      %s75 = scalar_select %p72, %s73, %s74
      %p78 = pneg %p72
      %p79 = scmp.eq.s32.totalorder %s11, 3
      %p80 = por %p78, %p79
      %p81 = scmp.ne.s32.totalorder %s73, %s76
      %p82 = scmp.eq.s32.totalorder %s11, 0
      %p83 = por %p81, %p82
      %p84 = scmp.ne.s32.totalorder %s73, %s76
      %p85 = scmp.eq.s32.totalorder %s16, 3
      %p86 = por %p84, %p85
      %p87 = scmp.ne.s32.totalorder %s76, %s77
      %p88 = scmp.eq.s32.totalorder %s16, 0
      %p89 = por %p87, %p88
      %p90 = scmp.ne.s32.totalorder %s76, %s77
      %p91 = scmp.eq.s32.totalorder %s17, 3
      %p92 = por %p90, %p91
      %p94 = scmp.ne.s32.totalorder %s77, %s93
      %p95 = scmp.eq.s32.totalorder %s17, 0
      %p96 = por %p94, %p95
      %s98 = sadd.s32 %s97, 1
      %p101 = scmp.eq.s32.totalorder %s11, 3
      %p102 = scmp.ne.s32.totalorder %s97, %s99
      %p103 = scmp.eq.s32.totalorder %s11, 0
      %p104 = por %p102, %p103
      %p105 = scmp.ne.s32.totalorder %s97, %s99
      %p106 = scmp.eq.s32.totalorder %s16, 3
      %p107 = por %p105, %p106
      %p108 = scmp.ne.s32.totalorder %s99, %s100
      %p109 = scmp.eq.s32.totalorder %s16, 0
      %p110 = por %p108, %p109
      %p111 = scmp.ne.s32.totalorder %s99, %s100
      %p112 = scmp.eq.s32.totalorder %s17, 3
      %p113 = por %p111, %p112
      %p115 = scmp.ne.s32.totalorder %s100, %s114
      %p116 = scmp.eq.s32.totalorder %s17, 0
      %p117 = por %p115, %p116
      %p118 = scmp.le.s32.totalorder 1, %s11
      %p119 = scmp.lt.s32.totalorder %s11, 5
      %p120 = pnand %p118, %p119
      %p121 = pneg %p120
      // Predicated region
      $region9: #{tpu_custom_call.1} parent=5 // pred_check
        _
      $region10: #{tpu_custom_call.1} parent=5 // pred_check_branch
        %123 = sbr.rel (%p120) target = $region12
      $region11: #{tpu_custom_call.1} parent=5 // pred_region
        %s124 = ssub.s32 %s11, 1
      $region12: #{tpu_custom_call.1} parent=5 // pred_fallthru
        _
      %p125 = scmp.lt.s32.totalorder %s11, 4
      // Predicated region
      $region13: #{tpu_custom_call.1} parent=5 // pred_check
        %p126 = pneg %p125
      $region14: #{tpu_custom_call.1} parent=5 // pred_check_branch
        %128 = sbr.rel (%p126) target = $region16
      $region15: #{tpu_custom_call.1} parent=5 // pred_region
        // Predicated region
        $region17: #{tpu_custom_call.1} parent=15 // pred_check
          %p129 = pneg %p31
        $region18: #{tpu_custom_call.1} parent=15 // pred_check_branch
          %131 = sbr.rel (%p129) target = $region20
        $region19: #{tpu_custom_call.1} parent=15 // pred_region
          %s132 = smul.u32 4, %s11
          %p133 = scmp.lt.s32.totalorder %s132, 15
          %s134 = scalar_select %p133, %s132, 15
          %s135 = smul.addr %s134, 8
          %s136 = scalar_lea.vmem %s0, %s135
          %s137 = smul.u32 4, %s11
        $region20: #{tpu_custom_call.1} parent=15 // pred_fallthru
          _
      $region16: #{tpu_custom_call.1} parent=5 // pred_fallthru
        _
      %p138 = scmp.le.s32.totalorder 1, %s11
      %p139 = scmp.lt.s32.totalorder %s11, 5
      %p140 = pnand %p138, %p139
      %p141 = pneg %p140
      // Predicated region
      $region21: #{tpu_custom_call.1} parent=5 // pred_check
        _
      $region22: #{tpu_custom_call.1} parent=5 // pred_check_branch
        %143 = sbr.rel (%p140) target = $region24
      $region23: #{tpu_custom_call.1} parent=5 // pred_region
        %s144 = ssub.s32 %s11, 1
        %s145 = smul.u32 4, %s16
        %p146 = scmp.lt.s32.totalorder %s145, 15
        %s147 = scalar_select %p146, %s145, 15
        %s148 = smul.addr %s147, 8
        %s149 = scalar_lea.vmem %s0, %s148
        %p150 = pneg %p37
        %p151 = pneg %p34
        %p152 = pneg %p63
        %p153 = pneg %p60
        %s154 = smul.u32 4, %s16
        %p155 = scmp.lt.s32.totalorder %s154, 15
        %s156 = scalar_select %p155, %s154, 15
        %s157 = smul.addr %s156, 2
        %s158 = smul.addr %s157, 8
        %s159 = scalar_lea.vmem %s1, %s158
        %p160 = pneg %p89
        %p161 = pneg %p86
        %p162 = scmp.lt.s32.totalorder %s16, 3
        %s163 = scalar_select %p162, %s16, 3
        %s164 = smul.addr %s163, 2
        %s165 = smul.addr %s164, 8
        %s166 = scalar_lea.vmem %s2, %s165
        %p167 = pneg %p110
        %p168 = pneg %p107
        %s169 = smul.u32 4, %s16
        %p170 = scmp.lt.s32.totalorder %s169, 15
        %s171 = scalar_select %p170, %s169, 15
        %s172 = smul.addr %s171, 8
        %s173 = scalar_lea.vmem %s0, %s172
        %s174 = smul.u32 4, %s16
        %s175 = smul.u32 4, %s16
        %p176 = scmp.lt.s32.totalorder %s175, 15
        %s177 = scalar_select %p176, %s175, 15
        %s178 = smul.addr %s177, 2
        %s179 = smul.addr %s178, 8
        %s180 = scalar_lea.vmem %s1, %s179
        %s181 = smul.u32 4, %s16
        %p182 = scmp.lt.s32.totalorder %s16, 3
        %s183 = scalar_select %p182, %s16, 3
        %s184 = smul.addr %s183, 2
        %s185 = smul.addr %s184, 8
        %s186 = scalar_lea.vmem %s2, %s185
        %v190 = vld [vmem:[%s173] sm:$0xff]
        %v191 = vld [vmem:[%s173 + $0x8] sm:$0xff]
        %v192 = vld [vmem:[%s173 + $0x10] sm:$0xff]
        %v193 = vld [vmem:[%s173 + $0x18] sm:$0xff]
        %p194 = scmp.eq.s32.totalorder %s16, 0
        // Predicated region
        $region25: #{tpu_custom_call.1} parent=23 // pred_check
          %p195 = pneg %p194
        $region26: #{tpu_custom_call.1} parent=23 // pred_check_branch
          %197 = sbr.rel (%p195) target = $region28
        $region27: #{tpu_custom_call.1} parent=23 // pred_region
          %vm198 = vcmask 57344
          %199 = vst.msk [vmem:[#allocation2] sm:$0x1] %vm198, 0.0
          %200 = vst.msk [vmem:[#allocation3] sm:$0x1] %vm198, 0.0
          %v201 = vlaneseq
          %v202 = vshrl.u32 %v201, 7
          %v203 = vadd.s32 %v202, 8
          %v204 = vadd.s32 %v202, 16
          %v205 = vadd.s32 %v202, 24
          %v206 = vlaneseq
          %v207 = vand.u32 %v206, 127
          %vm208 = vcmp.lt.s32.totalorder %v207, %v202
          %vm209 = vcmp.lt.s32.totalorder %v207, %v203
          %vm210 = vcmp.lt.s32.totalorder %v207, %v204
          %vm211 = vcmp.lt.s32.totalorder %v207, %v205
          %v212 = vsel %vm208, 1, 0
          %v213 = vsel %vm209, 1, 0
          %v214 = vsel %vm210, 1, 0
          %v215 = vsel %vm211, 1, 0
          %v216 = vcvt.s32.f32 %v212
          %v217 = vcvt.s32.f32 %v213
          %v218 = vcvt.s32.f32 %v214
          %v219 = vcvt.s32.f32 %v215
          %v220 = vpack.c.bf16 %v217, %v216
          %v221 = vpack.c.bf16 %v219, %v218
          %v224 = vunpack.c.l.b16 %v220
          %v225 = vunpack.c.h.b16 %v220
          %v226 = vunpack.c.l.b16 %v221
          %v227 = vunpack.c.h.b16 %v221
          %v228 = vpack.c.b16 %v224, %v224
          %v229 = vpack.c.b16 %v225, %v225
          %v230 = vpack.c.b16 %v226, %v226
          %v231 = vpack.c.b16 %v227, %v227
          %vm236 = vcmask 257024
          %237 = vst.msk [vmem:[#allocation4] sm:$0xf] %vm236, %v228
          %238 = vst.msk [vmem:[#allocation4 + $0x4] sm:$0xf] %vm236, %v229
          %239 = vst.msk [vmem:[#allocation4 + $0x8] sm:$0xf] %vm236, %v230
          %240 = vst.msk [vmem:[#allocation4 + $0xc] sm:$0xf] %vm236, %v231
        $region28: #{tpu_custom_call.1} parent=23 // pred_fallthru
          _
        %vm241 = vcmask 64512
        %v242 = vsel %vm241, %v190, -inf
        %243 = vmax.xlane.f32.xlu0 %v242
        %v244 = vpop.xlane.xlu0 %243
        %v245 = vsel %vm241, %v191, -inf
        %246 = vmax.xlane.f32.xlu0 %v245
        %v247 = vpop.xlane.xlu0 %246
        %v248 = vsel %vm241, %v192, -inf
        %249 = vmax.xlane.f32.xlu0 %v248
        %v250 = vpop.xlane.xlu0 %249
        %v251 = vsel %vm241, %v193, -inf
        %252 = vmax.xlane.f32.xlu0 %v251
        %v253 = vpop.xlane.xlu0 %252
        %v254 = vsub.f32 %v190, %v244
        %v255 = vsub.f32 %v191, %v247
        %v256 = vsub.f32 %v192, %v250
        %v257 = vsub.f32 %v193, %v253
        %v258 = vmul.f32 %v254, 1.442695
        %v259 = vpow.pop %v258
        %v260 = vmul.f32 %v255, 1.442695
        %v261 = vpow.pop %v260
        %v262 = vmul.f32 %v256, 1.442695
        %v263 = vpow.pop %v262
        %v264 = vmul.f32 %v257, 1.442695
        %v265 = vpow.pop %v264
        %v266 = vsel %vm241, %v259, 0.0
        %267 = vadd.xlane.f32.xlu0 %v266
        %v268 = vpop.xlane.xlu0 %267
        %v269 = vsel %vm241, %v261, 0.0
        %270 = vadd.xlane.f32.xlu0 %v269
        %v271 = vpop.xlane.xlu0 %270
        %v272 = vsel %vm241, %v263, 0.0
        %273 = vadd.xlane.f32.xlu0 %v272
        %v274 = vpop.xlane.xlu0 %273
        %v275 = vsel %vm241, %v265, 0.0
        %276 = vadd.xlane.f32.xlu0 %v275
        %v277 = vpop.xlane.xlu0 %276
        %v278 = vrcp.pop %v268
        %v279 = vmul.f32 1.0, %v278
        %v280 = vrcp.pop %v271
        %v281 = vmul.f32 1.0, %v280
        %v282 = vrcp.pop %v274
        %v283 = vmul.f32 1.0, %v282
        %v284 = vrcp.pop %v277
        %v285 = vmul.f32 1.0, %v284
        %v286 = vmul.f32 %v259, %v279
        %v287 = vmul.f32 %v261, %v281
        %v288 = vmul.f32 %v263, %v283
        %v289 = vmul.f32 %v265, %v285
        %v290 = vlaneseq
        %v291 = vand.u32 %v290, 127
        %vm292 = vcmp.eq.f32.partialorder %v190, %v244
        %vm293 = vcmp.eq.f32.partialorder %v191, %v247
        %vm294 = vcmp.eq.f32.partialorder %v192, %v250
        %vm295 = vcmp.eq.f32.partialorder %v193, %v253
        %v296 = vsel %vm292, %v291, 8
        %v297 = vsel %vm293, %v291, 8
        %v298 = vsel %vm294, %v291, 8
        %v299 = vsel %vm295, %v291, 8
        %v300 = vsel %vm241, %v296, 2147483647
        %v301 = vand.u32 %v300, 65535
        %v302 = vshra.s32 %v300, 16
        %v303 = vcvt.s32.f32 %v301
        %v304 = vcvt.s32.f32 %v302
        %305 = vmin.xlane.f32.xlu0 %v304
        %v306 = vpop.xlane.xlu0 %305
        %vm307 = vcmp.eq.f32.partialorder %v304, %v306
        %v308 = vsel %vm307, %v303, inf
        %309 = vmin.xlane.f32.xlu0 %v308
        %v310 = vpop.xlane.xlu0 %309
        %v311 = vcvt.f32.s32 %v310
        %v312 = vcvt.f32.s32 %v306
        %v313 = vshll.u32 %v312, 16
        %v314 = vadd.s32 %v313, %v311
        %v315 = vsel %vm241, %v297, 2147483647
        %v316 = vand.u32 %v315, 65535
        %v317 = vshra.s32 %v315, 16
        %v318 = vcvt.s32.f32 %v316
        %v319 = vcvt.s32.f32 %v317
        %320 = vmin.xlane.f32.xlu0 %v319
        %v321 = vpop.xlane.xlu0 %320
        %vm322 = vcmp.eq.f32.partialorder %v319, %v321
        %v323 = vsel %vm322, %v318, inf
        %324 = vmin.xlane.f32.xlu0 %v323
        %v325 = vpop.xlane.xlu0 %324
        %v326 = vcvt.f32.s32 %v325
        %v327 = vcvt.f32.s32 %v321
        %v328 = vshll.u32 %v327, 16
        %v329 = vadd.s32 %v328, %v326
        %v330 = vsel %vm241, %v298, 2147483647
        %v331 = vand.u32 %v330, 65535
        %v332 = vshra.s32 %v330, 16
        %v333 = vcvt.s32.f32 %v331
        %v334 = vcvt.s32.f32 %v332
        %335 = vmin.xlane.f32.xlu0 %v334
        %v336 = vpop.xlane.xlu0 %335
        %vm337 = vcmp.eq.f32.partialorder %v334, %v336
        %v338 = vsel %vm337, %v333, inf
        %339 = vmin.xlane.f32.xlu0 %v338
        %v340 = vpop.xlane.xlu0 %339
        %v341 = vcvt.f32.s32 %v340
        %v342 = vcvt.f32.s32 %v336
        %v343 = vshll.u32 %v342, 16
        %v344 = vadd.s32 %v343, %v341
        %v345 = vsel %vm241, %v299, 2147483647
        %v346 = vand.u32 %v345, 65535
        %v347 = vshra.s32 %v345, 16
        %v348 = vcvt.s32.f32 %v346
        %v349 = vcvt.s32.f32 %v347
        %350 = vmin.xlane.f32.xlu0 %v349
        %v351 = vpop.xlane.xlu0 %350
        %vm352 = vcmp.eq.f32.partialorder %v349, %v351
        %v353 = vsel %vm352, %v348, inf
        %354 = vmin.xlane.f32.xlu0 %v353
        %v355 = vpop.xlane.xlu0 %354
        %v356 = vcvt.f32.s32 %v355
        %v357 = vcvt.f32.s32 %v351
        %v358 = vshll.u32 %v357, 16
        %v359 = vadd.s32 %v358, %v356
        %vm360 = vcmp.eq.s32.totalorder %v291, %v314
        %vm361 = vcmp.eq.s32.totalorder %v291, %v329
        %vm362 = vcmp.eq.s32.totalorder %v291, %v344
        %vm363 = vcmp.eq.s32.totalorder %v291, %v359
        %v364 = vsel %vm360, 1, 0
        %v365 = vsel %vm361, 1, 0
        %v366 = vsel %vm362, 1, 0
        %v367 = vsel %vm363, 1, 0
        %v368 = vcvt.s32.f32 %v364
        %v369 = vcvt.s32.f32 %v365
        %v370 = vcvt.s32.f32 %v366
        %v371 = vcvt.s32.f32 %v367
        %v372 = vld [vmem:[#allocation4] sm:$0xf]
        %v373 = vld [vmem:[#allocation4 + $0x4] sm:$0xf]
        %v374 = vld [vmem:[#allocation4 + $0x8] sm:$0xf]
        %v375 = vld [vmem:[#allocation4 + $0xc] sm:$0xf]
        %v376 = vpack.c.bf16 %v369, %v368
        %v377 = vpack.c.bf16 %v371, %v370
        %v378 = vld [vmem:[#allocation2] sm:$0x1]
        %v380 = vlaneseq
        %v381 = vshrl.u32 %v380, 7
        %v382 = vsub.s32 0, %v381
        %v383 = vrot.slane %v378, %v382
        %v389 = vunpack.c.l.b16 %v372
        %v390 = vunpack.c.l.b16 %v373
        %v391 = vunpack.c.l.b16 %v374
        %v392 = vunpack.c.l.b16 %v375
        %v393 = vpack.c.b16 %v390, %v389
        %v394 = vpack.c.b16 %v392, %v391
        %vm395 = vcmask 261120
        %v397 = vsel %vm395, %v393, 0
        %v400 = vsel %vm395, %v394, 0
        %402 = vmatprep.subr.bf16.mxu0 0
        %403 = vmatpush1.bf16.msra.mxu0 0
        %404 = vmatprep.subr.bf16.mxu0 0
        %405 = vmatpush1.bf16.msra.mxu0 0
        %406 = vmatprep.subr.bf16.mxu0 0
        %407 = vmatpush1.bf16.msra.mxu0 0
        %408 = vmatprep.subr.bf16.mxu0 0
        %409 = vmatpush1.bf16.msra.mxu0 0
        %410 = vmatprep.subr.bf16.mxu0 0
        %411 = vmatpush1.bf16.msra.mxu0 0
        %412 = vmatprep.subr.bf16.mxu0 0
        %413 = vmatpush1.bf16.msra.mxu0 0
        %414 = vmatprep.subr.bf16.mxu0 0
        %415 = vmatpush1.bf16.msra.mxu0 %v377
        %416 = vmatprep.subr.bf16.mxu0 0
        %417 = vmatpush1.bf16.msra.mxu0 %v376
        %418 = vmatprep.subr.bf16.mxu0 0
        %419 = vmatpush2.bf16.msra.mxu0 0
        %420 = vmatprep.subr.bf16.mxu0 0
        %421 = vmatpush2.bf16.msra.mxu0 0
        %422 = vmatprep.subr.bf16.mxu0 0
        %423 = vmatpush2.bf16.msra.mxu0 0
        %424 = vmatprep.subr.bf16.mxu0 0
        %425 = vmatpush2.bf16.msra.mxu0 0
        %426 = vmatprep.subr.bf16.mxu0 0
        %427 = vmatpush2.bf16.msra.mxu0 0
        %428 = vmatprep.subr.bf16.mxu0 0
        %429 = vmatpush2.bf16.msra.mxu0 0
        %430 = vmatprep.subr.bf16.mxu0 0
        %431 = vmatpush2.bf16.msra.mxu0 0
        %432 = vmatprep.subr.bf16.mxu0 0
        %433 = vmatpush2.bf16.msra.mxu0 0
        %434 = vmatprep.mubr.bf16.mxu0 0
        %435 = vmatmul.mubr.bf16.gmra.mxu0 %v397
        %v436 = vpop.f32.mrf.mxu0
        %v437 = vadd.f32 %v383, %v436
        %v438 = vpop.f32.mrf.mxu0
        %v439 = vpop.f32.mrf.mxu0
        %v440 = vadd.f32 %v383, %v439
        %v441 = vpop.f32.mrf.mxu0
        %442 = vmatprep.mubr.bf16.mxu0 0
        %443 = vmatmul.mubr.bf16.gmra.mxu0 %v400
        %v444 = vpop.f32.mrf.mxu0
        %v445 = vadd.f32 %v383, %v444
        %v446 = vpop.f32.mrf.mxu0
        %v447 = vpop.f32.mrf.mxu0
        %v448 = vadd.f32 %v383, %v447
        %v449 = vpop.f32.mrf.mxu0
        %450 = vdwg.mxu0
        %v451 = vmul.f32 %v437, %v368
        %v452 = vmul.f32 %v440, %v369
        %v453 = vmul.f32 %v445, %v370
        %v454 = vmul.f32 %v448, %v371
        %v455 = vsel %vm241, %v451, 0.0
        %456 = vadd.xlane.f32.xlu0 %v455
        %v457 = vpop.xlane.xlu0 %456
        %v458 = vsel %vm241, %v452, 0.0
        %459 = vadd.xlane.f32.xlu0 %v458
        %v460 = vpop.xlane.xlu0 %459
        %v461 = vsel %vm241, %v453, 0.0
        %462 = vadd.xlane.f32.xlu0 %v461
        %v463 = vpop.xlane.xlu0 %462
        %v464 = vsel %vm241, %v454, 0.0
        %465 = vadd.xlane.f32.xlu0 %v464
        %v466 = vpop.xlane.xlu0 %465
        %vm467 = vcmp.lt.f32.partialorder %v457, 20.0
        %vm468 = vcmp.lt.f32.partialorder %v460, 20.0
        %vm469 = vcmp.lt.f32.partialorder %v463, 20.0
        %vm470 = vcmp.lt.f32.partialorder %v466, 20.0
        %v471 = vsel %vm241, %v368, 0.0
        %v472 = vsel %vm241, %v369, 0.0
        %v473 = vadd.f32 %v471, %v472
        %v474 = vsel %vm241, %v370, 0.0
        %v475 = vadd.f32 %v473, %v474
        %v476 = vsel %vm241, %v371, 0.0
        %v477 = vadd.f32 %v475, %v476
        %v478 = vrot.slane %v477, 4
        %v479 = vadd.f32 %v477, %v478
        %v480 = vrot.slane %v479, 2
        %v481 = vadd.f32 %v479, %v480
        %v482 = vrot.slane %v481, 1
        %v483 = vadd.f32 %v481, %v482
        %v484 = vadd.f32 %v378, %v483
        %vm485 = vcmask 57344
        %486 = vst.msk [vmem:[#allocation2] sm:$0x1] %vm485, %v484
        %v487 = vld [vmem:[#allocation3] sm:$0x1]
        %v488 = vsel %vm241, %v286, 0.0
        %v489 = vsel %vm241, %v287, 0.0
        %v490 = vadd.f32 %v488, %v489
        %v491 = vsel %vm241, %v288, 0.0
        %v492 = vadd.f32 %v490, %v491
        %v493 = vsel %vm241, %v289, 0.0
        %v494 = vadd.f32 %v492, %v493
        %v495 = vrot.slane %v494, 4
        %v496 = vadd.f32 %v494, %v495
        %v497 = vrot.slane %v496, 2
        %v498 = vadd.f32 %v496, %v497
        %v499 = vrot.slane %v498, 1
        %v500 = vadd.f32 %v498, %v499
        %v501 = vadd.f32 %v487, %v500
        %502 = vst.msk [vmem:[#allocation3] sm:$0x1] %vm485, %v501
        %v503 = vcvt.f32.s32.to.zero.pseudo %v457
        %v504 = vcvt.f32.s32.to.zero.pseudo %v460
        %v505 = vcvt.f32.s32.to.zero.pseudo %v463
        %v506 = vcvt.f32.s32.to.zero.pseudo %v466
        %v507 = vmul.u32 %v314, 20
        %v508 = vmul.u32 %v329, 20
        %v509 = vmul.u32 %v344, 20
        %v510 = vmul.u32 %v359, 20
        %v511 = vadd.s32 %v507, %v503
        %v512 = vadd.s32 %v508, %v504
        %v513 = vadd.s32 %v509, %v505
        %v514 = vadd.s32 %v510, %v506
        %v515 = vsel %vm467, %v511, 4294967295
        %v516 = vsel %vm468, %v512, 4294967295
        %v517 = vsel %vm469, %v513, 4294967295
        %v518 = vsel %vm470, %v514, 4294967295
        %v519 = vadd.s32 %v291, 128
        %vm520 = vcmp.eq.s32.totalorder %v291, %v515
        %vm521 = vcmp.eq.s32.totalorder %v519, %v515
        %vm522 = vcmp.eq.s32.totalorder %v291, %v516
        %vm523 = vcmp.eq.s32.totalorder %v519, %v516
        %vm524 = vcmp.eq.s32.totalorder %v291, %v517
        %vm525 = vcmp.eq.s32.totalorder %v519, %v517
        %vm526 = vcmp.eq.s32.totalorder %v291, %v518
        %vm527 = vcmp.eq.s32.totalorder %v519, %v518
        %v528 = vsel %vm520, %v279, 0.0
        %v529 = vsel %vm521, %v279, 0.0
        %v530 = vsel %vm522, %v281, 0.0
        %v531 = vsel %vm523, %v281, 0.0
        %v532 = vsel %vm524, %v283, 0.0
        %v533 = vsel %vm525, %v283, 0.0
        %v534 = vsel %vm526, %v285, 0.0
        %v535 = vsel %vm527, %v285, 0.0
        %536 = vst [vmem:[%s180] sm:$0xff] %v528
        %537 = vst.msk [vmem:[%s180 + $0x8] sm:$0xff] %vm395, %v529
        %538 = vst [vmem:[%s180 + $0x10] sm:$0xff] %v530
        %539 = vst.msk [vmem:[%s180 + $0x18] sm:$0xff] %vm395, %v531
        %540 = vst [vmem:[%s180 + $0x20] sm:$0xff] %v532
        %541 = vst.msk [vmem:[%s180 + $0x28] sm:$0xff] %vm395, %v533
        %542 = vst [vmem:[%s180 + $0x30] sm:$0xff] %v534
        %543 = vst.msk [vmem:[%s180 + $0x38] sm:$0xff] %vm395, %v535
        %vm544 = vmpackc.low %vm522, %vm520
        %vm545 = vmpackc.low %vm526, %vm524
        %vm546 = vmpackc.even %vm545, %vm544
        %vm547 = vmpackc.low %vm523, %vm521
        %vm548 = vmpackc.low %vm527, %vm525
        %vm549 = vmpackc.even %vm548, %vm547
        %v550 = vsel %vm546, 16843009, 0
        %v551 = vsel %vm549, 16843009, 0
        %552 = vst [vmem:[%s186] sm:$0xff] %v550
        %553 = vst.msk [vmem:[%s186 + $0x8] sm:$0xff] %vm395, %v551
        %p554 = scmp.eq.s32.totalorder %s16, 3
        // Predicated region
        $region29: #{tpu_custom_call.1} parent=23 // pred_check
          %p555 = pneg %p554
        $region30: #{tpu_custom_call.1} parent=23 // pred_check_branch
          %557 = sbr.rel (%p555) target = $region32
        $region31: #{tpu_custom_call.1} parent=23 // pred_region
          %v558 = vld [vmem:[#allocation3] sm:$0x1]
          %v559 = vmul.f32 %v558, 0.0078125
          %v560 = vld [vmem:[#allocation2] sm:$0x1]
          %v561 = vmul.f32 %v560, 0.0078125
          %v562 = vmul.f32 %v559, %v561
          %v563 = vsel %vm485, %v562, 0.0
          %564 = vadd.xlane.f32.xlu0 %v563
          %v565 = vpop.xlane.xlu0 %564
          %v566 = vmul.f32 %v565, 8.0
          %vm567 = vcmask 0
          %568 = vst.msk [vmem:[#allocation5] sm:$0x1] %vm567, %v566
        $region32: #{tpu_custom_call.1} parent=23 // pred_fallthru
          _
        %s569 = smul.u32 4, %s16
        %p570 = scmp.lt.s32.totalorder %s569, 15
        %s571 = scalar_select %p570, %s569, 15
        %s572 = smul.addr %s571, 2
        %s573 = smul.addr %s572, 8
        %s574 = scalar_lea.vmem %s1, %s573
        %p575 = scmp.lt.s32.totalorder %s16, 3
        %s576 = scalar_select %p575, %s16, 3
        %s577 = smul.addr %s576, 2
        %s578 = smul.addr %s577, 8
        %s579 = scalar_lea.vmem %s2, %s578
        // Predicated region
        $region33: #{tpu_custom_call.1} parent=23 // pred_check
          %p580 = pneg %p60
        $region34: #{tpu_custom_call.1} parent=23 // pred_check_branch
          %582 = sbr.rel (%p580) target = $region36
        $region35: #{tpu_custom_call.1} parent=23 // pred_region
          %s583 = smul.u32 4, %s16
        $region36: #{tpu_custom_call.1} parent=23 // pred_fallthru
          _
        // Predicated region
        $region37: #{tpu_custom_call.1} parent=23 // pred_check
          %p584 = pneg %p86
        $region38: #{tpu_custom_call.1} parent=23 // pred_check_branch
          %586 = sbr.rel (%p584) target = $region40
        $region39: #{tpu_custom_call.1} parent=23 // pred_region
          _
        $region40: #{tpu_custom_call.1} parent=23 // pred_fallthru
          _
        // Predicated region
        $region41: #{tpu_custom_call.1} parent=23 // pred_check
          %p587 = pneg %p107
        $region42: #{tpu_custom_call.1} parent=23 // pred_check_branch
          %589 = sbr.rel (%p587) target = $region44
        $region43: #{tpu_custom_call.1} parent=23 // pred_region
          %s591 = ssub.s32 16, 16
          %592 = vsyncadd [#allocation6], %s591
          %s594 = sshll.u32 [#allocation5], 4
          %s595 = int_to_ptr.vmem [resolvable:$true] %s594
          %597 = dma.vmem_to_hbm [thread:$0]  %s595, 16, %s3, [#allocation6]
        $region44: #{tpu_custom_call.1} parent=23 // pred_fallthru
          _
        // Predicated region
        $region45: #{tpu_custom_call.1} parent=23 // pred_check
          %p598 = pneg %p107
        $region46: #{tpu_custom_call.1} parent=23 // pred_check_branch
          %600 = sbr.rel (%p598) target = $region48
        $region47: #{tpu_custom_call.1} parent=23 // pred_region
          %601 = dma.done [#allocation6], 16
        $region48: #{tpu_custom_call.1} parent=23 // pred_fallthru
          _
      $region24: #{tpu_custom_call.1} parent=5 // pred_fallthru
        _
      %p602 = scmp.le.s32.totalorder 2, %s11
      // Predicated region
      $region49: #{tpu_custom_call.1} parent=5 // pred_check
        %p603 = pneg %p602
      $region50: #{tpu_custom_call.1} parent=5 // pred_check_branch
        %605 = sbr.rel (%p603) target = $region52
      $region51: #{tpu_custom_call.1} parent=5 // pred_region
        %s606 = ssub.s32 %s11, 2
        // Predicated region
        $region53: #{tpu_custom_call.1} parent=51 // pred_check
          %p607 = pneg %p66
        $region54: #{tpu_custom_call.1} parent=51 // pred_check_branch
          %609 = sbr.rel (%p607) target = $region56
        $region55: #{tpu_custom_call.1} parent=51 // pred_region
          %s610 = smul.u32 4, %s17
          %p611 = scmp.lt.s32.totalorder %s610, 15
          %s612 = scalar_select %p611, %s610, 15
          %s613 = smul.addr %s612, 2
          %s614 = smul.addr %s613, 8
          %s615 = scalar_lea.vmem %s1, %s614
        $region56: #{tpu_custom_call.1} parent=51 // pred_fallthru
          _
        // Predicated region
        $region57: #{tpu_custom_call.1} parent=51 // pred_check
          %p616 = pneg %p92
        $region58: #{tpu_custom_call.1} parent=51 // pred_check_branch
          %618 = sbr.rel (%p616) target = $region60
        $region59: #{tpu_custom_call.1} parent=51 // pred_region
          %p619 = scmp.lt.s32.totalorder %s17, 3
          %s620 = scalar_select %p619, %s17, 3
          %s621 = smul.addr %s620, 2
          %s622 = smul.addr %s621, 8
          %s623 = scalar_lea.vmem %s2, %s622
        $region60: #{tpu_custom_call.1} parent=51 // pred_fallthru
          _
      $region52: #{tpu_custom_call.1} parent=5 // pred_fallthru
        _
    $region6: #{tpu_custom_call.1} parent=1 // loop_footer
      %s15 = sadd.s32 1, %s11
    $region7: #{tpu_custom_call.1} parent=1 // loop_footer_branch
      %10 = sbr.rel target = $region3
    $region8: #{tpu_custom_call.1} parent=1 // loop_exit
      _
    %624 = vsyncpa [#allocation6], 1
    %s625 = scalar_lea.sflag [#allocation6], 1
    %626 = vsyncpa %s625, 1

</llo_original>
